<compile_context>
chip_gen: v7x
topology: tpu7x:2x2x1
jax: 0.10.0
libtpu: 0.0.40
codegen_flags: <defaults>
</compile_context>

<pallas_src>
import functools

import jax
import jax.numpy as jnp
from jax import lax
from jax.experimental import pallas as pl
from jax.experimental.pallas import tpu as pltpu

LANE = 128                              # lane width; channel dims padded to this
_VMEM_LIMIT = 32 * 1024 * 1024          # conservative scoped-VMEM (safe v5e/v6e/v7x)


def _round_up(x, m):
    return ((x + m - 1) // m) * m


def _pad2d(x, rows, cols, dtype=None):
    """Zero-pad a 2-D array to (rows, cols), optionally casting dtype."""
    out = jnp.zeros((rows, cols), x.dtype if dtype is None else dtype)
    return out.at[: x.shape[0], : x.shape[1]].set(x.astype(out.dtype))


# ---------------------------------------------------------------------------
# Pallas kernels
# ---------------------------------------------------------------------------

def sage_conv_kernel(a_ref, xsrc_ref, deg_ref, xtgt_ref, wl_ref, bl_ref, wr_ref,
                     o_ref, acc_ref):
    """Tiled SAGEConv (aggr='mean') fused with the following ReLU.

    Inner loop (over the n_src reduction axis):
        acc += A_block @ x_src_block            (bf16 MXU, f32 accumulate)
    Finalize (k == last):
        out = relu( (acc * 1/deg) @ W_l + b_l + x_tgt @ W_r )
    """
    k = pl.program_id(1)

    @pl.when(k == 0)
    def _init():
        acc_ref[...] = jnp.zeros_like(acc_ref)

    acc_ref[...] += jnp.dot(a_ref[...], xsrc_ref[...],
                            preferred_element_type=jnp.float32)

    @pl.when(k == pl.num_programs(1) - 1)
    def _finalize():
        inv_deg = pl.reciprocal(deg_ref[...], approx=True)       # EUP slot, ~free
        aggr = (acc_ref[...] * inv_deg).astype(jnp.bfloat16)
        out = jnp.dot(aggr, wl_ref[...], preferred_element_type=jnp.float32)
        out = out + jnp.dot(xtgt_ref[...], wr_ref[...],
                            preferred_element_type=jnp.float32)
        out = out + bl_ref[...]
        # ReLU fused here.  F.dropout(p=0.2) is identity in eval mode.
        o_ref[...] = jnp.maximum(out, 0.0).astype(o_ref.dtype)


def _head_kernel(x_ref, w1_ref, b1_ref, w2_ref, b2_ref, logp_ref, emb_ref,
                 *, num_classes):
    """fc1 -> (embedding, pre-ReLU) -> relu -> fc2 -> log_softmax, fused."""
    h = jnp.dot(x_ref[...], w1_ref[...], preferred_element_type=jnp.float32)
    h = h + b1_ref[...]
    emb_ref[...] = h                      # embedding = fc1 output (pre-ReLU)
    a = jnp.maximum(h, 0.0).astype(w2_ref.dtype)
    # TODO(synk): dropout(p=0.2) skipped (eval-mode identity).
    logits = jnp.dot(a, w2_ref[...], preferred_element_type=jnp.float32)
    logits = logits + b2_ref[...]
    # Mask the zero-padded class columns so log_softmax only sees real classes.
    col = lax.broadcasted_iota(jnp.int32, logits.shape, 1)
    logits = jnp.where(col < num_classes, logits, -1e30)
    m = jnp.max(logits, axis=-1, keepdims=True)
    s = logits - m
    lse = jnp.log(jnp.sum(jnp.exp(s), axis=-1, keepdims=True))
    logp_ref[...] = s - lse


# ---------------------------------------------------------------------------
# Wrappers (pallas_call plumbing)
# ---------------------------------------------------------------------------

def sage_conv(edge_index, n_src, n_dst, x, Wl, bl, Wr, *, tm_max=256, tk_max=512):
    """One SAGEConv(mean)+ReLU layer.

    x: [>= n_src, c_in_pad] bf16 node features (rows 0..n_src-1 are valid).
    Weights are pre-transposed and channel-padded to lane-dense widths.
    Returns [n_dst, c_out_pad] bf16.
    """
    c_in, c_out = Wl.shape

    tm = min(tm_max, _round_up(n_dst, 16))      # bf16 sublane packing -> mult. of 16
    tk = min(tk_max, _round_up(n_src, LANE))
    n_dst_p = _round_up(n_dst, tm)
    n_src_p = _round_up(n_src, tk)

    # Dense raw-count adjacency (scatter stays in XLA glue); normalization is
    # done in-kernel, so A is only ever read once, as bf16.
    src, dst = edge_index[0], edge_index[1]
    A = jnp.zeros((n_dst_p, n_src_p), jnp.float32).at[dst, src].add(1.0)
    deg = jnp.maximum(jnp.sum(A, axis=1, keepdims=True), 1.0)    # f32 [n_dst_p, 1]
    A = A.astype(jnp.bfloat16)

    x_src = _pad2d(x[:n_src], n_src_p, c_in, jnp.bfloat16)
    x_tgt = _pad2d(x[:n_dst], n_dst_p, c_in, jnp.bfloat16)

    grid = (n_dst_p // tm, n_src_p // tk)

    cost = pl.CostEstimate(
        flops=int(2 * n_dst_p * n_src_p * c_in + 4 * n_dst_p * c_in * c_out),
        transcendentals=int(n_dst_p),
        bytes_accessed=int(A.size * 2 + x_src.size * 2 + x_tgt.size * 2
                           + deg.size * 4 + (Wl.size + Wr.size) * 2
                           + bl.size * 4 + n_dst_p * c_out * 2),
    )

    out = pl.pallas_call(
        sage_conv_kernel,
        out_shape=jax.ShapeDtypeStruct((n_dst_p, c_out), jnp.bfloat16),
        grid=grid,
        in_specs=[
            pl.BlockSpec((tm, tk), lambda i, k: (i, k)),        # A block
            pl.BlockSpec((tk, c_in), lambda i, k: (k, 0)),      # x_src block
            pl.BlockSpec((tm, 1), lambda i, k: (i, 0)),         # deg block
            pl.BlockSpec((tm, c_in), lambda i, k: (i, 0)),      # x_tgt block
            pl.BlockSpec((c_in, c_out), lambda i, k: (0, 0)),   # W_l
            pl.BlockSpec((1, c_out), lambda i, k: (0, 0)),      # b_l
            pl.BlockSpec((c_in, c_out), lambda i, k: (0, 0)),   # W_r
        ],
        out_specs=pl.BlockSpec((tm, c_out), lambda i, k: (i, 0)),
        scratch_shapes=[pltpu.VMEM((tm, c_in), jnp.float32)],
        compiler_params=pltpu.CompilerParams(
            dimension_semantics=("parallel", "arbitrary"),
            vmem_limit_bytes=_VMEM_LIMIT,
        ),
        cost_estimate=cost,
    )(A, x_src, deg, x_tgt, Wl, bl, Wr)

    return out[:n_dst]


def mlp_head(x, W1, b1, W2, b2, *, hidden, num_classes, tm_max=512):
    """fc1 -> relu -> fc2 -> log_softmax (fused); also returns the embedding."""
    n = x.shape[0]
    h_pad = W1.shape[0]
    o_pad = W2.shape[1]

    tm = min(tm_max, _round_up(n, 16))
    n_p = _round_up(n, tm)
    x_p = _pad2d(x, n_p, h_pad, jnp.bfloat16)
    grid = (n_p // tm,)

    cost = pl.CostEstimate(
        flops=int(2 * n_p * h_pad * h_pad + 2 * n_p * h_pad * o_pad),
        transcendentals=int(n_p * o_pad),
        bytes_accessed=int(x_p.size * 2 + (W1.size + W2.size) * 2
                           + (b1.size + b2.size) * 4
                           + n_p * (o_pad + h_pad) * 4),
    )

    kernel = functools.partial(_head_kernel, num_classes=num_classes)
    logp, emb = pl.pallas_call(
        kernel,
        out_shape=(jax.ShapeDtypeStruct((n_p, o_pad), jnp.float32),
                   jax.ShapeDtypeStruct((n_p, h_pad), jnp.float32)),
        grid=grid,
        in_specs=[
            pl.BlockSpec((tm, h_pad), lambda i: (i, 0)),
            pl.BlockSpec((h_pad, h_pad), lambda i: (0, 0)),
            pl.BlockSpec((1, h_pad), lambda i: (0, 0)),
            pl.BlockSpec((h_pad, o_pad), lambda i: (0, 0)),
            pl.BlockSpec((1, o_pad), lambda i: (0, 0)),
        ],
        out_specs=(pl.BlockSpec((tm, o_pad), lambda i: (i, 0)),
                   pl.BlockSpec((tm, h_pad), lambda i: (i, 0))),
        compiler_params=pltpu.CompilerParams(
            dimension_semantics=("parallel",),
            vmem_limit_bytes=_VMEM_LIMIT,
        ),
        cost_estimate=cost,
    )(x_p, W1, b1, W2, b2)

    return logp[:n, :num_classes], emb[:n, :hidden]


# ---------------------------------------------------------------------------
# Forward pass (mirror of SAGE.forward in eval mode)
# ---------------------------------------------------------------------------

def sage_forward(x, adjs, params):
    meta = params["meta"]
    # Pad channels once to the lane-dense width and keep it through the stack.
    x = _pad2d(x, x.shape[0], meta["in_pad"], jnp.bfloat16)
    for i, (edge_index, _e_id, size) in enumerate(adjs):
        n_src, n_dst = size
        Wl, bl, Wr = params["convs"][i]
        # x_tgt = x[:n_dst] mirrors PyG's `x_target = x[:size[1]]` (target nodes
        # are the first n_dst rows of the source node set).
        x = sage_conv(edge_index, n_src, n_dst, x, Wl, bl, Wr)
    W1, b1, W2, b2 = params["head"]
    return mlp_head(x, W1, b1, W2, b2,
                    hidden=meta["hidden"], num_classes=meta["out_channels"])


def init_params(key, in_channels, out_channels, num_layers):
    """Weights pre-transposed ([in, out]) and zero-padded to multiples of 128.

    Padded rows/cols are zero, so they contribute nothing; padded bias entries
    are zero so padded output channels stay exactly zero through ReLU.
    """
    hidden = (in_channels + out_channels) // 2
    in_pad = _round_up(in_channels, LANE)
    hid_pad = _round_up(hidden, LANE)
    out_pad = _round_up(out_channels, LANE)

    dims = [in_channels] + [hidden] * num_layers
    dims_pad = [in_pad] + [hid_pad] * num_layers

    convs = []
    k = key
    for i in range(num_layers):
        c_in, c_out = dims[i], dims[i + 1]
        ci_p, co_p = dims_pad[i], dims_pad[i + 1]
        k, k1, k2 = jax.random.split(k, 3)
        Wl = 0.1 * jax.random.normal(k1, (c_in, c_out), jnp.float32)  # lin_l.weight.T
        Wr = 0.1 * jax.random.normal(k2, (c_in, c_out), jnp.float32)  # lin_r.weight.T
        bl = jnp.zeros((1, c_out), jnp.float32)                       # lin_l.bias
        convs.append((_pad2d(Wl, ci_p, co_p, jnp.bfloat16),
                      _pad2d(bl, 1, co_p, jnp.float32),
                      _pad2d(Wr, ci_p, co_p, jnp.bfloat16)))

    k, k1, k2 = jax.random.split(k, 3)
    W1 = 0.1 * jax.random.normal(k1, (hidden, hidden), jnp.float32)
    b1 = jnp.zeros((1, hidden), jnp.float32)
    W2 = 0.1 * jax.random.normal(k2, (hidden, out_channels), jnp.float32)
    b2 = jnp.zeros((1, out_channels), jnp.float32)
    head = (_pad2d(W1, hid_pad, hid_pad, jnp.bfloat16),
            _pad2d(b1, 1, hid_pad, jnp.float32),
            _pad2d(W2, hid_pad, out_pad, jnp.bfloat16),
            _pad2d(b2, 1, out_pad, jnp.float32))

    meta = {"in_pad": in_pad, "hidden": hidden, "out_channels": out_channels}
    return {"convs": convs, "head": head, "meta": meta}


# ---------------------------------------------------------------------------
# Demo
# ---------------------------------------------------------------------------

if __name__ == "__main__":
    key = jax.random.PRNGKey(0)

    in_channels, out_channels, num_layers = 16, 8, 2
    # Neighbor-sampled subgraph sizes per hop:
    #   layer 0: 32 source nodes -> 16 target nodes
    #   layer 1: 16 source nodes ->  8 target nodes
    N0, N1, N2 = 32, 16, 8
    E0, E1 = 64, 32

    key, kx, ke0s, ke0d, ke1s, ke1d, kp = jax.random.split(key, 7)
    x = jax.random.normal(kx, (N0, in_channels), jnp.float32)

    ei0 = jnp.stack([jax.random.randint(ke0s, (E0,), 0, N0),
                     jax.random.randint(ke0d, (E0,), 0, N1)])
    ei1 = jnp.stack([jax.random.randint(ke1s, (E1,), 0, N1),
                     jax.random.randint(ke1d, (E1,), 0, N2)])

    adjs = [(ei0, None, (N0, N1)),
            (ei1, None, (N1, N2))]

    params = init_params(kp, in_channels, out_channels, num_layers)

    log_probs, embedding = sage_forward(x, adjs, params)
    jax.block_until_ready((log_probs, embedding))

    hidden = (in_channels + out_channels) // 2
    assert log_probs.shape == (N2, out_channels)
    assert embedding.shape == (N2, hidden)
    assert bool(jnp.all(jnp.isfinite(log_probs)))
    print("KERNEL_OK")
</pallas_src>

<mosaic_0001>
module attributes {stable_mosaic.version = 11 : i64} {
  func.func @sage_conv_kernel(%arg0: i32, %arg1: i32, %arg2: memref<16x128xbf16, #tpu.memory_space<vmem>>, %arg3: memref<128x128xbf16, #tpu.memory_space<vmem>>, %arg4: memref<16x1xf32, #tpu.memory_space<vmem>>, %arg5: memref<16x128xbf16, #tpu.memory_space<vmem>>, %arg6: memref<128x128xbf16, #tpu.memory_space<vmem>>, %arg7: memref<1x128xf32, #tpu.memory_space<vmem>>, %arg8: memref<128x128xbf16, #tpu.memory_space<vmem>>, %arg9: memref<16x128xbf16, #tpu.memory_space<vmem>>, %arg10: memref<16x128xf32, #tpu.memory_space<vmem>>) attributes {dimension_semantics = [#tpu.dimension_semantics<parallel>, #tpu.dimension_semantics<arbitrary>], iteration_bounds = array<i64: 1, 1>, scalar_prefetch = 0 : i64, scratch_operands = 1 : i64, tpu.core_type = #tpu.core_type<tc>, window_params = [{transform_indices = @transform_0, window_bounds = array<i64: 16, 128>}, {transform_indices = @transform_1, window_bounds = array<i64: 128, 128>}, {transform_indices = @transform_2, window_bounds = array<i64: 16, 1>}, {transform_indices = @transform_3, window_bounds = array<i64: 16, 128>}, {pipeline_mode = #tpu.pipeline_mode<synchronous>, transform_indices = @transform_4, window_bounds = array<i64: 128, 128>}, {pipeline_mode = #tpu.pipeline_mode<synchronous>, transform_indices = @transform_5, window_bounds = array<i64: 1, 128>}, {pipeline_mode = #tpu.pipeline_mode<synchronous>, transform_indices = @transform_6, window_bounds = array<i64: 128, 128>}, {transform_indices = @transform_7, window_bounds = array<i64: 16, 128>}]} {
    %c0_i32 = arith.constant 0 : i32
    %0 = arith.cmpi eq, %arg1, %c0_i32 : i32
    %1 = arith.extui %0 : i1 to i32
    %c0_i32_0 = arith.constant 0 : i32
    %2 = arith.cmpi ne, %1, %c0_i32_0 : i32
    scf.if %2 {
      %cst_10 = arith.constant 0.000000e+00 : f32
      %12 = vector.broadcast %cst_10 : f32 to vector<16x128xf32>
      %c0_11 = arith.constant 0 : index
      %c0_12 = arith.constant 0 : index
      %13 = vector.load %arg10[%c0_11, %c0_12] : memref<16x128xf32, #tpu.memory_space<vmem>>, vector<16x128xf32>
      tpu.vector_store %arg10[%c0_11, %c0_12], %12 {strides = array<i32>} : memref<16x128xf32, #tpu.memory_space<vmem>>, vector<16x128xf32>,
    } else {
    }
    %c0 = arith.constant 0 : index
    %c0_1 = arith.constant 0 : index
    %3 = vector.load %arg10[%c0, %c0_1] : memref<16x128xf32, #tpu.memory_space<vmem>>, vector<16x128xf32>
    %c0_2 = arith.constant 0 : index
    %c0_3 = arith.constant 0 : index
    %4 = vector.load %arg2[%c0_2, %c0_3] : memref<16x128xbf16, #tpu.memory_space<vmem>>, vector<16x128xbf16>
    %c0_4 = arith.constant 0 : index
    %c0_5 = arith.constant 0 : index
    %5 = vector.load %arg3[%c0_4, %c0_5] : memref<128x128xbf16, #tpu.memory_space<vmem>>, vector<128x128xbf16>
    %cst = arith.constant dense<0.000000e+00> : vector<16x128xf32>
    %6 = tpu.matmul %4, %5, %cst {dimension_numbers = #tpu.dot_dimension_numbers<[1], [0], [0], [1], [0, 0, 1, 1], [], []>} : vector<16x128xbf16>, vector<128x128xbf16>, vector<16x128xf32> -> vector<16x128xf32>
    %7 = arith.addf %3, %6 : vector<16x128xf32>
    %c0_6 = arith.constant 0 : index
    %c0_7 = arith.constant 0 : index
    %8 = vector.load %arg10[%c0_6, %c0_7] : memref<16x128xf32, #tpu.memory_space<vmem>>, vector<16x128xf32>
    tpu.vector_store %arg10[%c0_6, %c0_7], %7 {strides = array<i32>} : memref<16x128xf32, #tpu.memory_space<vmem>>, vector<16x128xf32>,
    %c0_i32_8 = arith.constant 0 : i32
    %9 = arith.cmpi eq, %arg1, %c0_i32_8 : i32
    %10 = arith.extui %9 : i1 to i32
    %c0_i32_9 = arith.constant 0 : i32
    %11 = arith.cmpi ne, %10, %c0_i32_9 : i32
    scf.if %11 {
      %c0_10 = arith.constant 0 : index
      %c0_11 = arith.constant 0 : index
      %12 = vector.load %arg4[%c0_10, %c0_11] : memref<16x1xf32, #tpu.memory_space<vmem>>, vector<16x1xf32>
      %13 = tpu.reciprocal %12 {approx = true} : vector<16x1xf32> -> vector<16x1xf32>
      %c0_12 = arith.constant 0 : index
      %c0_13 = arith.constant 0 : index
      %14 = vector.load %arg10[%c0_12, %c0_13] : memref<16x128xf32, #tpu.memory_space<vmem>>, vector<16x128xf32>
      %15 = vector.broadcast %13 : vector<16x1xf32> to vector<16x128xf32>
      %16 = arith.mulf %14, %15 : vector<16x128xf32>
      %17 = arith.truncf %16 : vector<16x128xf32> to vector<16x128xbf16>
      %c0_14 = arith.constant 0 : index
      %c0_15 = arith.constant 0 : index
      %18 = vector.load %arg6[%c0_14, %c0_15] : memref<128x128xbf16, #tpu.memory_space<vmem>>, vector<128x128xbf16>
      %cst_16 = arith.constant dense<0.000000e+00> : vector<16x128xf32>
      %19 = tpu.matmul %17, %18, %cst_16 {dimension_numbers = #tpu.dot_dimension_numbers<[1], [0], [0], [1], [0, 0, 1, 1], [], []>} : vector<16x128xbf16>, vector<128x128xbf16>, vector<16x128xf32> -> vector<16x128xf32>
      %c0_17 = arith.constant 0 : index
      %c0_18 = arith.constant 0 : index
      %20 = vector.load %arg5[%c0_17, %c0_18] : memref<16x128xbf16, #tpu.memory_space<vmem>>, vector<16x128xbf16>
      %c0_19 = arith.constant 0 : index
      %c0_20 = arith.constant 0 : index
      %21 = vector.load %arg8[%c0_19, %c0_20] : memref<128x128xbf16, #tpu.memory_space<vmem>>, vector<128x128xbf16>
      %cst_21 = arith.constant dense<0.000000e+00> : vector<16x128xf32>
      %22 = tpu.matmul %20, %21, %cst_21 {dimension_numbers = #tpu.dot_dimension_numbers<[1], [0], [0], [1], [0, 0, 1, 1], [], []>} : vector<16x128xbf16>, vector<128x128xbf16>, vector<16x128xf32> -> vector<16x128xf32>
      %23 = arith.addf %19, %22 : vector<16x128xf32>
      %c0_22 = arith.constant 0 : index
      %c0_23 = arith.constant 0 : index
      %24 = vector.load %arg7[%c0_22, %c0_23] : memref<1x128xf32, #tpu.memory_space<vmem>>, vector<1x128xf32>
      %25 = vector.broadcast %24 : vector<1x128xf32> to vector<16x128xf32>
      %26 = arith.addf %23, %25 : vector<16x128xf32>
      %cst_24 = arith.constant 0.000000e+00 : f32
      %27 = vector.broadcast %cst_24 : f32 to vector<16x128xf32>
      %28 = arith.maximumf %26, %27 : vector<16x128xf32>
      %29 = arith.truncf %28 : vector<16x128xf32> to vector<16x128xbf16>
      %c0_25 = arith.constant 0 : index
      %c0_26 = arith.constant 0 : index
      %30 = vector.load %arg9[%c0_25, %c0_26] : memref<16x128xbf16, #tpu.memory_space<vmem>>, vector<16x128xbf16>
      tpu.vector_store %arg9[%c0_25, %c0_26], %29 {strides = array<i32>} : memref<16x128xbf16, #tpu.memory_space<vmem>>, vector<16x128xbf16>,
    } else {
    }
    return
  }
  func.func @transform_0(%arg0: i32, %arg1: i32) -> (i32, i32) {
    %c0_i32 = arith.constant 0 : i32
    return %arg0, %arg1 : i32, i32
  }
  func.func @transform_1(%arg0: i32, %arg1: i32) -> (i32, i32) {
    %c0_i32 = arith.constant 0 : i32
    %c0_i32_0 = arith.constant 0 : i32
    return %arg1, %c0_i32 : i32, i32
  }
  func.func @transform_2(%arg0: i32, %arg1: i32) -> (i32, i32) {
    %c0_i32 = arith.constant 0 : i32
    %c0_i32_0 = arith.constant 0 : i32
    return %arg0, %c0_i32 : i32, i32
  }
  func.func @transform_3(%arg0: i32, %arg1: i32) -> (i32, i32) {
    %c0_i32 = arith.constant 0 : i32
    %c0_i32_0 = arith.constant 0 : i32
    return %arg0, %c0_i32 : i32, i32
  }
  func.func @transform_4(%arg0: i32, %arg1: i32) -> (i32, i32) {
    %c0_i32 = arith.constant 0 : i32
    %c0_i32_0 = arith.constant 0 : i32
    %c0_i32_1 = arith.constant 0 : i32
    return %c0_i32, %c0_i32_0 : i32, i32
  }
  func.func @transform_5(%arg0: i32, %arg1: i32) -> (i32, i32) {
    %c0_i32 = arith.constant 0 : i32
    %c0_i32_0 = arith.constant 0 : i32
    %c0_i32_1 = arith.constant 0 : i32
    return %c0_i32, %c0_i32_0 : i32, i32
  }
  func.func @transform_6(%arg0: i32, %arg1: i32) -> (i32, i32) {
    %c0_i32 = arith.constant 0 : i32
    %c0_i32_0 = arith.constant 0 : i32
    %c0_i32_1 = arith.constant 0 : i32
    return %c0_i32, %c0_i32_0 : i32, i32
  }
  func.func @transform_7(%arg0: i32, %arg1: i32) -> (i32, i32) {
    %c0_i32 = arith.constant 0 : i32
    %c0_i32_0 = arith.constant 0 : i32
    return %arg0, %c0_i32 : i32, i32
  }
}

</mosaic_0001>

<llo_original>
// kernel: tpu_custom_call.1
$region0: #{tpu_custom_call.1}
  #allocation0 [shape = 'u32[]', space=smem, size = 0x4, offset = 0x4, fixed_abs, tag = 'smem constant byte address 0x4 - core index']
  #allocation1 [shape = 'u32[144,128]{1,0:T(1,128)}', space=vmem, size = 0x12000, scoped, tag = 'internal scratch']
  #allocation2 [shape = 'f32[16,128]{1,0:T(8,128)}', space=vmem, size = 0x2000, scoped, tag = 'scratch operand']
  %s0 = inlined_call_operand.vmem [shape: bf16[16,128], index: 0, kind: input, shape index: {}]
  %s1 = inlined_call_operand.hbm [shape: bf16[128,128], index: 1, kind: input, shape index: {}]
  %s2 = inlined_call_operand.vmem [shape: f32[16,1], index: 2, kind: input, shape index: {}]
  %s3 = inlined_call_operand.vmem [shape: bf16[16,128], index: 3, kind: input, shape index: {}]
  %s4 = inlined_call_operand.hbm [shape: bf16[128,128], index: 4, kind: input, shape index: {}]
  %s5 = inlined_call_operand.vmem [shape: f32[1,128], index: 5, kind: input, shape index: {}]
  %s6 = inlined_call_operand.hbm [shape: bf16[128,128], index: 6, kind: input, shape index: {}]
  %s7 = inlined_call_operand.hbm [shape: bf16[16,128], index: 7, kind: output, shape index: {}]
  %s8 = sld [smem:[#allocation0]]
  $region58: #{tpu_custom_call.1} parent=0
    _
  %s10 = ssub.s32 1, %s8
  %s11 = scalar_select 0, %s10, %s8
  $region1: #{tpu_custom_call.1} parent=0
    #allocation3 [shape = 'u8[32768]{0}', space=vmem, size = 0x8000, scoped, tag = 'input window, operand 1, single buffered']
    #allocation4 [shape = 's32[1]{0}', space=sflag, size = 0x4, scoped, tag = 'scoped memory for tpu_custom_call.1']
    #allocation5 [shape = 's32[1]{0}', space=sflag, size = 0x4, scoped, tag = 'scoped memory for tpu_custom_call.1']
    #allocation6 [shape = 'u8[32768]{0}', space=vmem, size = 0x8000, scoped, tag = 'input window, operand 4, single buffered']
    #allocation7 [shape = 's32[1]{0}', space=sflag, size = 0x4, scoped, tag = 'scoped memory for tpu_custom_call.1']
    #allocation8 [shape = 'u8[32768]{0}', space=vmem, size = 0x8000, scoped, tag = 'input window, operand 6, single buffered']
    #allocation9 [shape = 'u8[4096]{0}', space=vmem, size = 0x1000, scoped, tag = 'output window, operand 0, single buffered']
    %12 = vsyncpa [#allocation4], 0
    %13 = vsyncpa [#allocation7], 0
    %14 = vsyncpa [#allocation5], 0
    // Predicated region
    $region2: #{tpu_custom_call.1} parent=1 // pred_check
      _
    $region3: #{tpu_custom_call.1} parent=1 // pred_check_branch
      %16 = sbr.rel (0) target = $region5
    $region4: #{tpu_custom_call.1} parent=1 // pred_region
      _
    $region5: #{tpu_custom_call.1} parent=1 // pred_fallthru
      _
    // Predicated region
    $region6: #{tpu_custom_call.1} parent=1 // pred_check
      _
    $region7: #{tpu_custom_call.1} parent=1 // pred_check_branch
      %18 = sbr.rel (0) target = $region9
    $region8: #{tpu_custom_call.1} parent=1 // pred_region
      %s20 = ssub.s32 1024, 1024
      %21 = vsyncadd [#allocation4], %s20
      %s22 = sshll.u32 [#allocation3], 4
      %s23 = int_to_ptr.vmem [resolvable:$true] %s22
      %28 = dma.hbm_to_vmem [thread:$0]  %s1, 1024, %s23, [#allocation4], 64, 64, 4
    $region9: #{tpu_custom_call.1} parent=1 // pred_fallthru
      _
    // Predicated region
    $region10: #{tpu_custom_call.1} parent=1 // pred_check
      _
    $region11: #{tpu_custom_call.1} parent=1 // pred_check_branch
      %30 = sbr.rel (0) target = $region13
    $region12: #{tpu_custom_call.1} parent=1 // pred_region
      _
    $region13: #{tpu_custom_call.1} parent=1 // pred_fallthru
      _
    // Predicated region
    $region14: #{tpu_custom_call.1} parent=1 // pred_check
      _
    $region15: #{tpu_custom_call.1} parent=1 // pred_check_branch
      %32 = sbr.rel (0) target = $region17
    $region16: #{tpu_custom_call.1} parent=1 // pred_region
      _
    $region17: #{tpu_custom_call.1} parent=1 // pred_fallthru
      _
    // Predicated region
    $region18: #{tpu_custom_call.1} parent=1 // pred_check
      _
    $region19: #{tpu_custom_call.1} parent=1 // pred_check_branch
      %34 = sbr.rel (0) target = $region21
    $region20: #{tpu_custom_call.1} parent=1 // pred_region
      %s36 = ssub.s32 1024, 1024
      %37 = vsyncadd [#allocation7], %s36
      %s38 = sshll.u32 [#allocation6], 4
      %s39 = int_to_ptr.vmem [resolvable:$true] %s38
      %44 = dma.hbm_to_vmem [thread:$0]  %s4, 1024, %s39, [#allocation7], 64, 64, 4
    $region21: #{tpu_custom_call.1} parent=1 // pred_fallthru
      _
    // Predicated region
    $region22: #{tpu_custom_call.1} parent=1 // pred_check
      _
    $region23: #{tpu_custom_call.1} parent=1 // pred_check_branch
      %46 = sbr.rel (0) target = $region25
    $region24: #{tpu_custom_call.1} parent=1 // pred_region
      _
    $region25: #{tpu_custom_call.1} parent=1 // pred_fallthru
      _
    // Predicated region
    $region26: #{tpu_custom_call.1} parent=1 // pred_check
      _
    $region27: #{tpu_custom_call.1} parent=1 // pred_check_branch
      %48 = sbr.rel (0) target = $region29
    $region28: #{tpu_custom_call.1} parent=1 // pred_region
      %s50 = ssub.s32 1024, 1024
      %51 = vsyncadd [#allocation7], %s50
      %s52 = sshll.u32 [#allocation8], 4
      %s53 = int_to_ptr.vmem [resolvable:$true] %s52
      %58 = dma.hbm_to_vmem [thread:$0]  %s6, 1024, %s53, [#allocation7], 64, 64, 4
    $region29: #{tpu_custom_call.1} parent=1 // pred_fallthru
      _
    // Predicated region
    $region30: #{tpu_custom_call.1} parent=1 // pred_check
      _
    $region31: #{tpu_custom_call.1} parent=1 // pred_check_branch
      %60 = sbr.rel (0) target = $region33
    $region32: #{tpu_custom_call.1} parent=1 // pred_region
      %61 = dma.done [#allocation4], 1024
    $region33: #{tpu_custom_call.1} parent=1 // pred_fallthru
      _
    // Predicated region
    $region34: #{tpu_custom_call.1} parent=1 // pred_check
      _
    $region35: #{tpu_custom_call.1} parent=1 // pred_check_branch
      %63 = sbr.rel (0) target = $region37
    $region36: #{tpu_custom_call.1} parent=1 // pred_region
      %64 = dma.done [#allocation7], 1024
    $region37: #{tpu_custom_call.1} parent=1 // pred_fallthru
      _
    // Predicated region
    $region38: #{tpu_custom_call.1} parent=1 // pred_check
      _
    $region39: #{tpu_custom_call.1} parent=1 // pred_check_branch
      %66 = sbr.rel (0) target = $region41
    $region40: #{tpu_custom_call.1} parent=1 // pred_region
      %67 = dma.done [#allocation7], 1024
    $region41: #{tpu_custom_call.1} parent=1 // pred_fallthru
      _
    %p69 = scmp.eq.s32.totalorder 0, 0
    // Predicated region
    $region42: #{tpu_custom_call.1} parent=1 // pred_check
      %p70 = pneg %p69
    $region43: #{tpu_custom_call.1} parent=1 // pred_check_branch
      %72 = sbr.rel (%p70) target = $region45
    $region44: #{tpu_custom_call.1} parent=1 // pred_region
      %73 = vst [vmem:[#allocation2] sm:$0xff] 0.0
      %74 = vst [vmem:[#allocation2 + $0x8] sm:$0xff] 0.0
    $region45: #{tpu_custom_call.1} parent=1 // pred_fallthru
      _
    %v75 = vld [vmem:[#allocation2] sm:$0xff]
    %v76 = vld [vmem:[#allocation2 + $0x8] sm:$0xff]
    %v77 = vld [vmem:[%s0] sm:$0xf]
    %v78 = vld [vmem:[%s0 + $0x4] sm:$0xf]
    %v79 = vld [vmem:[#allocation3] sm:$0xf]
    %v80 = vld [vmem:[#allocation3 + $0x4] sm:$0xf]
    %v81 = vld [vmem:[#allocation3 + $0x8] sm:$0xf]
    %v82 = vld [vmem:[#allocation3 + $0xc] sm:$0xf]
    %v83 = vld [vmem:[#allocation3 + $0x10] sm:$0xf]
    %v84 = vld [vmem:[#allocation3 + $0x14] sm:$0xf]
    %v85 = vld [vmem:[#allocation3 + $0x18] sm:$0xf]
    %v86 = vld [vmem:[#allocation3 + $0x1c] sm:$0xf]
    %v87 = vld [vmem:[#allocation3 + $0x20] sm:$0xf]
    %v88 = vld [vmem:[#allocation3 + $0x24] sm:$0xf]
    %v89 = vld [vmem:[#allocation3 + $0x28] sm:$0xf]
    %v90 = vld [vmem:[#allocation3 + $0x2c] sm:$0xf]
    %v91 = vld [vmem:[#allocation3 + $0x30] sm:$0xf]
    %v92 = vld [vmem:[#allocation3 + $0x34] sm:$0xf]
    %v93 = vld [vmem:[#allocation3 + $0x38] sm:$0xf]
    %v94 = vld [vmem:[#allocation3 + $0x3c] sm:$0xf]
    %v97 = vunpack.c.l.b16 %v77
    %v98 = vunpack.c.l.b16 %v78
    %v99 = vpack.c.b16 %v98, %v97
    %v117 = vunpack.c.l.b16 %v79
    %v118 = vunpack.c.l.b16 %v80
    %v119 = vunpack.c.l.b16 %v81
    %v120 = vunpack.c.l.b16 %v82
    %v121 = vunpack.c.l.b16 %v83
    %v122 = vunpack.c.l.b16 %v84
    %v123 = vunpack.c.l.b16 %v85
    %v124 = vunpack.c.l.b16 %v86
    %v125 = vunpack.c.l.b16 %v87
    %v126 = vunpack.c.l.b16 %v88
    %v127 = vunpack.c.l.b16 %v89
    %v128 = vunpack.c.l.b16 %v90
    %v129 = vunpack.c.l.b16 %v91
    %v130 = vunpack.c.l.b16 %v92
    %v131 = vunpack.c.l.b16 %v93
    %v132 = vunpack.c.l.b16 %v94
    %v133 = vpack.c.b16 %v118, %v117
    %v134 = vpack.c.b16 %v120, %v119
    %v135 = vpack.c.b16 %v122, %v121
    %v136 = vpack.c.b16 %v124, %v123
    %v137 = vpack.c.b16 %v126, %v125
    %v138 = vpack.c.b16 %v128, %v127
    %v139 = vpack.c.b16 %v130, %v129
    %v140 = vpack.c.b16 %v132, %v131
    %149 = vmatprep.subr.bf16.mxu0 0
    %150 = vmatpush1.bf16.msra.mxu0 %v133
    %151 = vmatprep.subr.bf16.mxu0 0
    %152 = vmatpush1.bf16.msra.mxu0 %v134
    %153 = vmatprep.subr.bf16.mxu0 0
    %154 = vmatpush1.bf16.msra.mxu0 %v135
    %155 = vmatprep.subr.bf16.mxu0 0
    %156 = vmatpush1.bf16.msra.mxu0 %v136
    %157 = vmatprep.subr.bf16.mxu0 0
    %158 = vmatpush1.bf16.msra.mxu0 %v137
    %159 = vmatprep.subr.bf16.mxu0 0
    %160 = vmatpush1.bf16.msra.mxu0 %v138
    %161 = vmatprep.subr.bf16.mxu0 0
    %162 = vmatpush1.bf16.msra.mxu0 %v139
    %163 = vmatprep.subr.bf16.mxu0 0
    %164 = vmatpush1.bf16.msra.mxu0 %v140
    %165 = vmatprep.subr.bf16.mxu0 0
    %166 = vmatpush1.bf16.msra.mxu0 0
    %167 = vmatprep.subr.bf16.mxu0 0
    %168 = vmatpush1.bf16.msra.mxu0 0
    %169 = vmatprep.subr.bf16.mxu0 0
    %170 = vmatpush1.bf16.msra.mxu0 0
    %171 = vmatprep.subr.bf16.mxu0 0
    %172 = vmatpush1.bf16.msra.mxu0 0
    %173 = vmatprep.subr.bf16.mxu0 0
    %174 = vmatpush1.bf16.msra.mxu0 0
    %175 = vmatprep.subr.bf16.mxu0 0
    %176 = vmatpush1.bf16.msra.mxu0 0
    %177 = vmatprep.subr.bf16.mxu0 0
    %178 = vmatpush1.bf16.msra.mxu0 0
    %179 = vmatprep.subr.bf16.mxu0 0
    %180 = vmatpush1.bf16.msra.mxu0 0
    %181 = vmatprep.mubr.bf16.mxu0 0
    %182 = vmatmul.mubr.bf16.gmra.mrb[0].mxu0 %v99
    %v183 = vpop.f32.mrb[0].mxu0
    %v184 = vadd.f32 0.0, %v183
    %v185 = vpop.f32.mrb[0].mxu0
    %v186 = vpop.f32.mrb[0].mxu0
    %v187 = vadd.f32 0.0, %v186
    %v188 = vpop.f32.mrb[0].mxu0
    %189 = vdwg.mxu0
    %v190 = vadd.f32 %v75, %v184
    %v191 = vadd.f32 %v76, %v187
    %192 = vst [vmem:[#allocation2] sm:$0xff] %v190
    %193 = vst [vmem:[#allocation2 + $0x8] sm:$0xff] %v191
    // Predicated region
    $region46: #{tpu_custom_call.1} parent=1 // pred_check
      %p194 = pneg %p69
    $region47: #{tpu_custom_call.1} parent=1 // pred_check_branch
      %196 = sbr.rel (%p194) target = $region49
    $region48: #{tpu_custom_call.1} parent=1 // pred_region
      %v197 = vld [vmem:[%s2] sm:$0xff]
      %v198 = vld [vmem:[%s2 + $0x8] sm:$0xff]
      %v199 = vrcp.pop %v197
      %v200 = vrcp.pop %v198
      %v201 = vld [vmem:[#allocation2] sm:$0xff]
      %v202 = vld [vmem:[#allocation2 + $0x8] sm:$0xff]
      %204 = vset.pattern.permute.xlu0 0
      %205 = vperm.xlu0 %204, %v199
      %v206 = vpop.permute.xlu0 %205
      %209 = vset.pattern.permute.xlu0 0
      %210 = vperm.xlu0 %209, %v200
      %v211 = vpop.permute.xlu0 %210
      %v213 = vmul.f32 %v201, %v206
      %v214 = vmul.f32 %v202, %v211
      %v215 = vpack.c.bf16 %v214, %v213
      %v216 = vld [vmem:[#allocation6] sm:$0xf]
      %v217 = vld [vmem:[#allocation6 + $0x4] sm:$0xf]
      %v218 = vld [vmem:[#allocation6 + $0x8] sm:$0xf]
      %v219 = vld [vmem:[#allocation6 + $0xc] sm:$0xf]
      %v220 = vld [vmem:[#allocation6 + $0x10] sm:$0xf]
      %v221 = vld [vmem:[#allocation6 + $0x14] sm:$0xf]
      %v222 = vld [vmem:[#allocation6 + $0x18] sm:$0xf]
      %v223 = vld [vmem:[#allocation6 + $0x1c] sm:$0xf]
      %v224 = vld [vmem:[#allocation6 + $0x20] sm:$0xf]
      %v225 = vld [vmem:[#allocation6 + $0x24] sm:$0xf]
      %v226 = vld [vmem:[#allocation6 + $0x28] sm:$0xf]
      %v227 = vld [vmem:[#allocation6 + $0x2c] sm:$0xf]
      %v228 = vld [vmem:[#allocation6 + $0x30] sm:$0xf]
      %v229 = vld [vmem:[#allocation6 + $0x34] sm:$0xf]
      %v230 = vld [vmem:[#allocation6 + $0x38] sm:$0xf]
      %v231 = vld [vmem:[#allocation6 + $0x3c] sm:$0xf]
      %v232 = vld [vmem:[%s3] sm:$0xf]
      %v233 = vld [vmem:[%s3 + $0x4] sm:$0xf]
      %v234 = vld [vmem:[#allocation8] sm:$0xf]
      %v235 = vld [vmem:[#allocation8 + $0x4] sm:$0xf]
      %v236 = vld [vmem:[#allocation8 + $0x8] sm:$0xf]
      %v237 = vld [vmem:[#allocation8 + $0xc] sm:$0xf]
      %v238 = vld [vmem:[#allocation8 + $0x10] sm:$0xf]
      %v239 = vld [vmem:[#allocation8 + $0x14] sm:$0xf]
      %v240 = vld [vmem:[#allocation8 + $0x18] sm:$0xf]
      %v241 = vld [vmem:[#allocation8 + $0x1c] sm:$0xf]
      %v242 = vld [vmem:[#allocation8 + $0x20] sm:$0xf]
      %v243 = vld [vmem:[#allocation8 + $0x24] sm:$0xf]
      %v244 = vld [vmem:[#allocation8 + $0x28] sm:$0xf]
      %v245 = vld [vmem:[#allocation8 + $0x2c] sm:$0xf]
      %v246 = vld [vmem:[#allocation8 + $0x30] sm:$0xf]
      %v247 = vld [vmem:[#allocation8 + $0x34] sm:$0xf]
      %v248 = vld [vmem:[#allocation8 + $0x38] sm:$0xf]
      %v249 = vld [vmem:[#allocation8 + $0x3c] sm:$0xf]
      %v252 = vunpack.c.l.b16 %v232
      %v253 = vunpack.c.l.b16 %v233
      %v254 = vpack.c.b16 %v253, %v252
      %v272 = vunpack.c.l.b16 %v234
      %v273 = vunpack.c.l.b16 %v235
      %v274 = vunpack.c.l.b16 %v236
      %v275 = vunpack.c.l.b16 %v237
      %v276 = vunpack.c.l.b16 %v238
      %v277 = vunpack.c.l.b16 %v239
      %v278 = vunpack.c.l.b16 %v240
      %v279 = vunpack.c.l.b16 %v241
      %v280 = vunpack.c.l.b16 %v242
      %v281 = vunpack.c.l.b16 %v243
      %v282 = vunpack.c.l.b16 %v244
      %v283 = vunpack.c.l.b16 %v245
      %v284 = vunpack.c.l.b16 %v246
      %v285 = vunpack.c.l.b16 %v247
      %v286 = vunpack.c.l.b16 %v248
      %v287 = vunpack.c.l.b16 %v249
      %v288 = vpack.c.b16 %v273, %v272
      %v289 = vpack.c.b16 %v275, %v274
      %v290 = vpack.c.b16 %v277, %v276
      %v291 = vpack.c.b16 %v279, %v278
      %v292 = vpack.c.b16 %v281, %v280
      %v293 = vpack.c.b16 %v283, %v282
      %v294 = vpack.c.b16 %v285, %v284
      %v295 = vpack.c.b16 %v287, %v286
      %304 = vmatprep.subr.bf16.mxu0 0
      %305 = vmatpush1.bf16.msra.mxu0 %v288
      %306 = vmatprep.subr.bf16.mxu0 0
      %307 = vmatpush1.bf16.msra.mxu0 %v289
      %308 = vmatprep.subr.bf16.mxu0 0
      %309 = vmatpush1.bf16.msra.mxu0 %v290
      %310 = vmatprep.subr.bf16.mxu0 0
      %311 = vmatpush1.bf16.msra.mxu0 %v291
      %312 = vmatprep.subr.bf16.mxu0 0
      %313 = vmatpush1.bf16.msra.mxu0 %v292
      %314 = vmatprep.subr.bf16.mxu0 0
      %315 = vmatpush1.bf16.msra.mxu0 %v293
      %316 = vmatprep.subr.bf16.mxu0 0
      %317 = vmatpush1.bf16.msra.mxu0 %v294
      %318 = vmatprep.subr.bf16.mxu0 0
      %319 = vmatpush1.bf16.msra.mxu0 %v295
      %320 = vmatprep.subr.bf16.mxu0 0
      %321 = vmatpush1.bf16.msra.mxu0 0
      %322 = vmatprep.subr.bf16.mxu0 0
      %323 = vmatpush1.bf16.msra.mxu0 0
      %324 = vmatprep.subr.bf16.mxu0 0
      %325 = vmatpush1.bf16.msra.mxu0 0
      %326 = vmatprep.subr.bf16.mxu0 0
      %327 = vmatpush1.bf16.msra.mxu0 0
      %328 = vmatprep.subr.bf16.mxu0 0
      %329 = vmatpush1.bf16.msra.mxu0 0
      %330 = vmatprep.subr.bf16.mxu0 0
      %331 = vmatpush1.bf16.msra.mxu0 0
      %332 = vmatprep.subr.bf16.mxu0 0
      %333 = vmatpush1.bf16.msra.mxu0 0
      %334 = vmatprep.subr.bf16.mxu0 0
      %335 = vmatpush1.bf16.msra.mxu0 0
      %336 = vmatprep.mubr.bf16.mxu0 0
      %337 = vmatmul.mubr.bf16.gmra.mrb[0].mxu0 %v254
      %v338 = vpop.f32.mrb[0].mxu0
      %v339 = vadd.f32 0.0, %v338
      %v340 = vpop.f32.mrb[0].mxu0
      %v341 = vpop.f32.mrb[0].mxu0
      %v342 = vadd.f32 0.0, %v341
      %v343 = vpop.f32.mrb[0].mxu0
      %344 = vdwg.mxu0
      %v361 = vunpack.c.l.b16 %v216
      %v362 = vunpack.c.l.b16 %v217
      %v363 = vunpack.c.l.b16 %v218
      %v364 = vunpack.c.l.b16 %v219
      %v365 = vunpack.c.l.b16 %v220
      %v366 = vunpack.c.l.b16 %v221
      %v367 = vunpack.c.l.b16 %v222
      %v368 = vunpack.c.l.b16 %v223
      %v369 = vunpack.c.l.b16 %v224
      %v370 = vunpack.c.l.b16 %v225
      %v371 = vunpack.c.l.b16 %v226
      %v372 = vunpack.c.l.b16 %v227
      %v373 = vunpack.c.l.b16 %v228
      %v374 = vunpack.c.l.b16 %v229
      %v375 = vunpack.c.l.b16 %v230
      %v376 = vunpack.c.l.b16 %v231
      %v377 = vpack.c.b16 %v362, %v361
      %v378 = vpack.c.b16 %v364, %v363
      %v379 = vpack.c.b16 %v366, %v365
      %v380 = vpack.c.b16 %v368, %v367
      %v381 = vpack.c.b16 %v370, %v369
      %v382 = vpack.c.b16 %v372, %v371
      %v383 = vpack.c.b16 %v374, %v373
      %v384 = vpack.c.b16 %v376, %v375
      %393 = vmatprep.subr.bf16.mxu0 0
      %394 = vmatpush1.bf16.msra.mxu0 %v377
      %395 = vmatprep.subr.bf16.mxu0 0
      %396 = vmatpush1.bf16.msra.mxu0 %v378
      %397 = vmatprep.subr.bf16.mxu0 0
      %398 = vmatpush1.bf16.msra.mxu0 %v379
      %399 = vmatprep.subr.bf16.mxu0 0
      %400 = vmatpush1.bf16.msra.mxu0 %v380
      %401 = vmatprep.subr.bf16.mxu0 0
      %402 = vmatpush1.bf16.msra.mxu0 %v381
      %403 = vmatprep.subr.bf16.mxu0 0
      %404 = vmatpush1.bf16.msra.mxu0 %v382
      %405 = vmatprep.subr.bf16.mxu0 0
      %406 = vmatpush1.bf16.msra.mxu0 %v383
      %407 = vmatprep.subr.bf16.mxu0 0
      %408 = vmatpush1.bf16.msra.mxu0 %v384
      %409 = vmatprep.subr.bf16.mxu0 0
      %410 = vmatpush1.bf16.msra.mxu0 0
      %411 = vmatprep.subr.bf16.mxu0 0
      %412 = vmatpush1.bf16.msra.mxu0 0
      %413 = vmatprep.subr.bf16.mxu0 0
      %414 = vmatpush1.bf16.msra.mxu0 0
      %415 = vmatprep.subr.bf16.mxu0 0
      %416 = vmatpush1.bf16.msra.mxu0 0
      %417 = vmatprep.subr.bf16.mxu0 0
      %418 = vmatpush1.bf16.msra.mxu0 0
      %419 = vmatprep.subr.bf16.mxu0 0
      %420 = vmatpush1.bf16.msra.mxu0 0
      %421 = vmatprep.subr.bf16.mxu0 0
      %422 = vmatpush1.bf16.msra.mxu0 0
      %423 = vmatprep.subr.bf16.mxu0 0
      %424 = vmatpush1.bf16.msra.mxu0 0
      %425 = vmatprep.mubr.bf16.mxu0 0
      %426 = vmatmul.mubr.bf16.gmra.mrb[0].mxu0 %v215
      %v427 = vpop.f32.mrb[0].mxu0
      %v428 = vadd.f32 %v339, %v427
      %v429 = vpop.f32.mrb[0].mxu0
      %v430 = vpop.f32.mrb[0].mxu0
      %v431 = vadd.f32 %v342, %v430
      %v432 = vpop.f32.mrb[0].mxu0
      %433 = vdwg.mxu0
      %v434 = vld [vmem:[%s5] sm:$0x1]
      %v436 = vlaneseq
      %v437 = vshrl.u32 %v436, 7
      %v438 = vsub.s32 0, %v437
      %v439 = vrot.slane %v434, %v438
      %v441 = vadd.f32 %v428, %v439
      %v442 = vadd.f32 %v431, %v439
      %v443 = vmax.f32 %v441, 0.0
      %v444 = vmax.f32 %v442, 0.0
      %v445 = vpack.c.bf16 %v444, %v443
      %v447 = vunpack.c.l.b16 %v445
      %v448 = vunpack.c.h.b16 %v445
      %v449 = vpack.c.b16 %v447, %v447
      %v450 = vpack.c.b16 %v448, %v448
      %453 = vst [vmem:[#allocation9] sm:$0xf] %v449
      %454 = vst [vmem:[#allocation9 + $0x4] sm:$0xf] %v450
    $region49: #{tpu_custom_call.1} parent=1 // pred_fallthru
      _
    // Predicated region
    $region50: #{tpu_custom_call.1} parent=1 // pred_check
      _
    $region51: #{tpu_custom_call.1} parent=1 // pred_check_branch
      %456 = sbr.rel (0) target = $region53
    $region52: #{tpu_custom_call.1} parent=1 // pred_region
      %s458 = ssub.s32 128, 128
      %459 = vsyncadd [#allocation5], %s458
      %s460 = sshll.u32 [#allocation9], 4
      %s461 = int_to_ptr.vmem [resolvable:$true] %s460
      %466 = dma.vmem_to_hbm [thread:$0]  %s461, 128, %s7, [#allocation5], 64, 64, 4
    $region53: #{tpu_custom_call.1} parent=1 // pred_fallthru
      _
    // Predicated region
    $region54: #{tpu_custom_call.1} parent=1 // pred_check
      _
    $region55: #{tpu_custom_call.1} parent=1 // pred_check_branch
      %468 = sbr.rel (0) target = $region57
    $region56: #{tpu_custom_call.1} parent=1 // pred_region
      %469 = dma.done [#allocation5], 128
    $region57: #{tpu_custom_call.1} parent=1 // pred_fallthru
      _
    %470 = vsyncpa [#allocation4], 1
    %471 = vsyncpa [#allocation7], 1
    %472 = vsyncpa [#allocation5], 1

</llo_original>
